<compile_context>
chip_gen: v6e
topology: v6e:2x2x1
jax: 0.10.0
libtpu: 0.0.40
codegen_flags: <defaults>
</compile_context>

<pallas_src>
import functools
import math

import jax
import jax.numpy as jnp
from jax import lax
from jax.experimental import pallas as pl
from jax.experimental.pallas import tpu as pltpu

W_PARAM = 10.0
E_PARAM = 2.0
INV_E = 1.0 / E_PARAM
C_PARAM = W_PARAM - W_PARAM * math.log(1.0 + W_PARAM / E_PARAM)

LANES = 128
ACC_ROWS = 8            # (8, 128) f32 = one vreg-shaped partial-sum accumulator
ALIGN = ACC_ROWS * LANES  # 1024 elements: kernel prefix alignment
STRIP_ROWS = 256        # rows processed per inner fori_loop step inside a block


def _tpu_defaults():
    """(max_tile_rows, num_cores) tuned per TPU generation.

    Per-step input buffers = tile_rows*128*4 B * 2 inputs * 2 pipeline buffers;
    must fit the default scoped-VMEM limit (v5e 16 MiB, v6e/v7x 32 MiB).
    """
    kind = ""
    try:
        kind = jax.devices()[0].device_kind.lower()
    except Exception:
        pass
    if "v7" in kind or "7x" in kind:
        return 8192, 2      # 16 MiB of input buffers; 2 TensorCores per chip
    if "v6" in kind:
        return 8192, 1      # 16 MiB buffers < 32 MiB default scoped VMEM; 1 TC
    return 4096, 1          # v5e / older / unknown: 8 MiB < 16 MiB default; 1 TC


def _wing_elem(x, t):
    """Elementwise WingLoss contribution (used for the ragged jnp tail)."""
    x = x.astype(jnp.float32)
    t = t.astype(jnp.float32)
    diff = jnp.where(t == -1.0, 0.0, x - t)
    ad = jnp.abs(diff)
    return jnp.where(ad < W_PARAM, W_PARAM * jnp.log1p(ad * INV_E), ad - C_PARAM)


def _make_kernel(*, tile_rows, kpp, nblocks, rows, strip_rows, num_cores):
    """Kernel closure over static tiling constants."""
    n_full = tile_rows // strip_rows
    rem = tile_rows - n_full * strip_rows            # multiple of ACC_ROWS
    last_ragged = (rows % tile_rows) != 0
    has_dups = num_cores * kpp > nblocks
    # Blocks with logical index >= mask_from need the row-validity mask
    # (ragged tail rows and/or fully-duplicated clamped blocks).
    mask_from = (nblocks - 1) if last_ragged else nblocks
    need_mask = last_ragged or has_dups

    def strip_sum(x_ref, t_ref, r0, nrows, keep_fn):
        x = x_ref[pl.ds(r0, nrows), :].astype(jnp.float32)
        t = t_ref[pl.ds(r0, nrows), :].astype(jnp.float32)
        valid = t != -1.0                             # ignore-target sentinel
        if keep_fn is not None:
            valid = jnp.logical_and(valid, keep_fn(r0, nrows))
        # Select (not multiply-by-mask) so garbage/NaN rows cannot poison sums.
        diff = jnp.where(valid, x - t, 0.0)
        ad = jnp.abs(diff)
        y = jnp.where(ad < W_PARAM,
                      W_PARAM * jnp.log1p(ad * INV_E),   # log1p -> EUP slot
                      ad - C_PARAM)
        # Collapse row-groups of 8 with vreg-to-vreg adds; the tiny cross-lane
        # reduction happens once in the wrapper.
        return y.reshape(nrows // ACC_ROWS, ACC_ROWS, LANES).sum(axis=0)

    def block_sum(x_ref, t_ref, keep_fn):
        acc0 = jnp.zeros((ACC_ROWS, LANES), jnp.float32)

        def body(s, acc):
            r0 = pl.multiple_of(s * strip_rows, strip_rows)
            return acc + strip_sum(x_ref, t_ref, r0, strip_rows, keep_fn)

        acc = lax.fori_loop(0, n_full, body, acc0) if n_full > 0 else acc0
        if rem > 0:  # static trailing strip when strip_rows doesn't divide tile
            acc = acc + strip_sum(x_ref, t_ref, n_full * strip_rows, rem, keep_fn)
        return acc

    def kernel(x_ref, t_ref, o_ref):
        p = pl.program_id(0)
        k = pl.program_id(1)

        @pl.when(k == 0)
        def _():
            o_ref[...] = jnp.zeros_like(o_ref)

        blk = p * kpp + k                     # logical (un-clamped) block index

        if not need_mask:
            # Fast path only: every block holds fully valid data.
            o_ref[...] += block_sum(x_ref, t_ref, None)
        else:
            row0 = blk * tile_rows

            def keep_fn(r0, nrows):
                rid = row0 + r0 + lax.broadcasted_iota(jnp.int32, (nrows, LANES), 0)
                return rid < rows

            @pl.when(blk < mask_from)
            def _():  # interior blocks: no iota / row mask
                o_ref[...] += block_sum(x_ref, t_ref, None)

            @pl.when(blk >= mask_from)
            def _():  # ragged last block and clamped duplicate blocks
                o_ref[...] += block_sum(x_ref, t_ref, keep_fn)

    return kernel


@functools.partial(jax.jit, static_argnums=(2, 3))
def _wing_loss_impl(x, t, max_tile_rows, num_cores):
    x_flat = jnp.ravel(x)
    t_flat = jnp.ravel(t)
    n = x_flat.shape[0]

    # Kernel covers the 1024-element-aligned prefix; the small ragged tail
    # (< 1024 elements) is reduced with plain jnp -- no full-array pad copy.
    n_main = (n // ALIGN) * ALIGN
    tail = n - n_main

    total = jnp.float32(0.0)
    if tail:
        total = total + jnp.sum(_wing_elem(x_flat[n_main:], t_flat[n_main:]))
    if n_main == 0:
        return total

    rows = n_main // LANES                               # multiple of 8
    x2 = (x_flat[:n_main] if tail else x_flat).reshape(rows, LANES)
    t2 = (t_flat[:n_main] if tail else t_flat).reshape(rows, LANES)

    # Sanitize static tiling parameters (correctness concern: tile rows must
    # be a multiple of 8 for the (8,128) block constraint and the reshape).
    max_tile_rows = max(ACC_ROWS, (int(max_tile_rows) // ACC_ROWS) * ACC_ROWS)
    num_cores = max(1, int(num_cores))

    tile_rows = min(max_tile_rows, rows)                 # multiple of 8
    nblocks = pl.cdiv(rows, tile_rows)
    ncores = num_cores if nblocks >= 2 else 1
    kpp = pl.cdiv(nblocks, ncores)                       # k-steps per core slice
    strip_rows = min(STRIP_ROWS, tile_rows)              # multiple of 8

    def in_map(p, k):
        # Clamp so the DMA never targets a fully out-of-range block; duplicated
        # data it fetches is zeroed by the (pl.when-gated) row mask in-kernel.
        return (jnp.minimum(p * kpp + k, nblocks - 1), 0)

    out = pl.pallas_call(
        _make_kernel(tile_rows=tile_rows, kpp=kpp, nblocks=nblocks,
                     rows=rows, strip_rows=strip_rows, num_cores=ncores),
        out_shape=jax.ShapeDtypeStruct((ncores * ACC_ROWS, LANES), jnp.float32),
        grid_spec=pltpu.PrefetchScalarGridSpec(
            num_scalar_prefetch=0,
            grid=(ncores, kpp),
            in_specs=[
                pl.BlockSpec((tile_rows, LANES), in_map),
                pl.BlockSpec((tile_rows, LANES), in_map),
            ],
            out_specs=pl.BlockSpec((ACC_ROWS, LANES), lambda p, k: (p, 0)),
        ),
        compiler_params=pltpu.CompilerParams(
            dimension_semantics=("parallel", "arbitrary"),
        ),
    )(x2, t2)

    # Final tiny cross-lane / cross-core reduction + ragged tail.
    return total + jnp.sum(out)


def wing_loss(x, t, *, max_tile_rows=None, num_cores=None):
    """Computes WingLoss(w=10, e=2).forward(x, t); returns a scalar f32.

    Note: the reference `sigma` argument is unused by the PyTorch forward and
    is therefore omitted. Targets exactly equal to -1.0 are ignored (weight 0).
    """
    d_tile, d_cores = _tpu_defaults()
    if max_tile_rows is None:
        max_tile_rows = d_tile
    if num_cores is None:
        num_cores = d_cores
    return _wing_loss_impl(x, t, int(max_tile_rows), int(num_cores))


def _reference(x, t):
    x = x.astype(jnp.float32)
    t = t.astype(jnp.float32)
    weight = jnp.where(t == -1.0, 0.0, 1.0)
    diff = weight * (x - t)
    abs_diff = jnp.abs(diff)
    flag = (abs_diff < W_PARAM).astype(jnp.float32)
    y = flag * W_PARAM * jnp.log1p(abs_diff / E_PARAM) + (1.0 - flag) * (
        abs_diff - C_PARAM
    )
    return jnp.sum(y)


def _make_inputs(key, shape):
    kx, kt, km = jax.random.split(key, 3)
    x = jax.random.normal(kx, shape, dtype=jnp.float32) * 5.0
    t = jax.random.normal(kt, shape, dtype=jnp.float32) * 5.0
    mask = jax.random.bernoulli(km, p=0.2, shape=shape)
    t = jnp.where(mask, -1.0, t)   # exercise the ignore-target (weight 0) path
    return x, t


if __name__ == "__main__":
    key = jax.random.PRNGKey(0)
    k1, k2 = jax.random.split(key)

    # 1) Landmark-style NCHW input [2, 4, 16, 16] (exactly lane-aligned:
    #    zero-copy slab, single block, fast path only).
    x, t = _make_inputs(k1, (2, 4, 16, 16))
    loss = jax.block_until_ready(wing_loss(x, t))
    ref = jax.block_until_ready(_reference(x, t))
    assert jnp.allclose(loss, ref, rtol=1e-5, atol=1e-2), (loss, ref)

    # 2) Ragged shape + small forced tile + forced 2-way core split:
    #    exercises the jnp tail path, the multi-block reduction, the
    #    non-multiple-of-8 max_tile_rows sanitization, the pl.when-gated
    #    ragged-row mask, and a clamped duplicate block (odd block count).
    x2, t2 = _make_inputs(k2, (3, 5, 77, 97))
    loss2 = jax.block_until_ready(wing_loss(x2, t2, max_tile_rows=83, num_cores=2))
    ref2 = jax.block_until_ready(_reference(x2, t2))
    assert jnp.allclose(loss2, ref2, rtol=1e-5, atol=1e-2), (loss2, ref2)

    print("KERNEL_OK")
</pallas_src>

<mosaic_0001>
module attributes {stable_mosaic.version = 11 : i64} {
  func.func @kernel(%arg0: i32, %arg1: i32, %arg2: memref<16x128xf32, #tpu.memory_space<vmem>>, %arg3: memref<16x128xf32, #tpu.memory_space<vmem>>, %arg4: memref<8x128xf32, #tpu.memory_space<vmem>>) attributes {dimension_semantics = [#tpu.dimension_semantics<parallel>, #tpu.dimension_semantics<arbitrary>], iteration_bounds = array<i64: 1, 1>, scalar_prefetch = 0 : i64, scratch_operands = 0 : i64, tpu.core_type = #tpu.core_type<tc>, window_params = [{transform_indices = @transform_0, window_bounds = array<i64: 16, 128>}, {transform_indices = @transform_1, window_bounds = array<i64: 16, 128>}, {transform_indices = @transform_2, window_bounds = array<i64: 8, 128>}]} {
    %c0_i32 = arith.constant 0 : i32
    %0 = arith.cmpi eq, %arg1, %c0_i32 : i32
    %1 = arith.extui %0 : i1 to i32
    %c0_i32_0 = arith.constant 0 : i32
    %2 = arith.cmpi ne, %1, %c0_i32_0 : i32
    scf.if %2 {
      %cst_14 = arith.constant 0.000000e+00 : f32
      %32 = vector.broadcast %cst_14 : f32 to vector<8x128xf32>
      %c0_15 = arith.constant 0 : index
      %c0_16 = arith.constant 0 : index
      %33 = vector.load %arg4[%c0_15, %c0_16] : memref<8x128xf32, #tpu.memory_space<vmem>>, vector<8x128xf32>
      tpu.vector_store %arg4[%c0_15, %c0_16], %32 {strides = array<i32>} : memref<8x128xf32, #tpu.memory_space<vmem>>, vector<8x128xf32>,
    } else {
    }
    %c0 = arith.constant 0 : index
    %c0_1 = arith.constant 0 : index
    %3 = vector.load %arg4[%c0, %c0_1] : memref<8x128xf32, #tpu.memory_space<vmem>>, vector<8x128xf32>
    %cst = arith.constant 0.000000e+00 : f32
    %4 = vector.broadcast %cst : f32 to vector<8x128xf32>
    %c0_i32_2 = arith.constant 0 : i32
    %c16_i32 = arith.constant 16 : i32
    %5 = arith.muli %c0_i32_2, %c16_i32 : i32
    %6 = tpu.assume_multiple %5, 16 : i32
    %7 = arith.index_cast %6 : i32 to index
    %c0_3 = arith.constant 0 : index
    %8 = vector.load %arg2[%7, %c0_3] : memref<16x128xf32, #tpu.memory_space<vmem>>, vector<16x128xf32>
    %9 = arith.index_cast %6 : i32 to index
    %c0_4 = arith.constant 0 : index
    %10 = vector.load %arg3[%9, %c0_4] : memref<16x128xf32, #tpu.memory_space<vmem>>, vector<16x128xf32>
    %cst_5 = arith.constant -1.000000e+00 : f32
    %11 = vector.broadcast %cst_5 : f32 to vector<16x128xf32>
    %12 = arith.cmpf one, %10, %11 : vector<16x128xf32>
    %13 = arith.subf %8, %10 : vector<16x128xf32>
    %cst_6 = arith.constant 0.000000e+00 : f32
    %14 = vector.broadcast %cst_6 : f32 to vector<16x128xf32>
    %15 = arith.select %12, %13, %14 : vector<16x128xi1>, vector<16x128xf32>
    %16 = math.absf %15 : vector<16x128xf32>
    %cst_7 = arith.constant 1.000000e+01 : f32
    %17 = vector.broadcast %cst_7 : f32 to vector<16x128xf32>
    %18 = arith.cmpf olt, %16, %17 : vector<16x128xf32>
    %cst_8 = arith.constant 5.000000e-01 : f32
    %19 = vector.broadcast %cst_8 : f32 to vector<16x128xf32>
    %20 = arith.mulf %16, %19 : vector<16x128xf32>
    %21 = math.log1p %20 : vector<16x128xf32>
    %cst_9 = arith.constant 1.000000e+01 : f32
    %22 = vector.broadcast %cst_9 : f32 to vector<16x128xf32>
    %23 = arith.mulf %22, %21 : vector<16x128xf32>
    %cst_10 = arith.constant -7.9175949 : f32
    %24 = vector.broadcast %cst_10 : f32 to vector<16x128xf32>
    %25 = arith.subf %16, %24 : vector<16x128xf32>
    %26 = arith.select %18, %23, %25 : vector<16x128xi1>, vector<16x128xf32>
    %27 = vector.shape_cast %26 : vector<16x128xf32> to vector<2x8x128xf32>
    %cst_11 = arith.constant dense<0.000000e+00> : vector<8x128xf32>
    %28 = vector.multi_reduction <add>, %27, %cst_11 [0] : vector<2x8x128xf32> to vector<8x128xf32>
    %29 = arith.addf %4, %28 : vector<8x128xf32>
    %c1_i32 = arith.constant 1 : i32
    %30 = arith.addf %3, %29 : vector<8x128xf32>
    %c0_12 = arith.constant 0 : index
    %c0_13 = arith.constant 0 : index
    %31 = vector.load %arg4[%c0_12, %c0_13] : memref<8x128xf32, #tpu.memory_space<vmem>>, vector<8x128xf32>
    tpu.vector_store %arg4[%c0_12, %c0_13], %30 {strides = array<i32>} : memref<8x128xf32, #tpu.memory_space<vmem>>, vector<8x128xf32>,
    return
  }
  func.func @transform_0(%arg0: i32, %arg1: i32) -> (i32, i32) {
    %c1_i32 = arith.constant 1 : i32
    %0 = arith.muli %arg0, %c1_i32 : i32
    %1 = arith.addi %0, %arg1 : i32
    %c0_i32 = arith.constant 0 : i32
    %2 = arith.minsi %1, %c0_i32 : i32
    %c0_i32_0 = arith.constant 0 : i32
    %c0_i32_1 = arith.constant 0 : i32
    return %2, %c0_i32_0 : i32, i32
  }
  func.func @transform_1(%arg0: i32, %arg1: i32) -> (i32, i32) {
    %c1_i32 = arith.constant 1 : i32
    %0 = arith.muli %arg0, %c1_i32 : i32
    %1 = arith.addi %0, %arg1 : i32
    %c0_i32 = arith.constant 0 : i32
    %2 = arith.minsi %1, %c0_i32 : i32
    %c0_i32_0 = arith.constant 0 : i32
    %c0_i32_1 = arith.constant 0 : i32
    return %2, %c0_i32_0 : i32, i32
  }
  func.func @transform_2(%arg0: i32, %arg1: i32) -> (i32, i32) {
    %c0_i32 = arith.constant 0 : i32
    %c0_i32_0 = arith.constant 0 : i32
    return %arg0, %c0_i32 : i32, i32
  }
}

</mosaic_0001>

<llo_original>
// kernel: _wing_loss_impl.1
$region0: #{_wing_loss_impl.1}
  #allocation0 [shape = 'u32[]', space=smem, size = 0x4, offset = 0x4, fixed_abs, tag = 'smem constant byte address 0x4 - core index']
  #allocation1 [shape = 'u32[144,128]{1,0:T(1,128)}', space=vmem, size = 0x12000, scoped, tag = 'internal scratch']
  %s0 = inlined_call_operand.vmem [shape: f32[16,128], index: 0, kind: input, shape index: {}]
  %s1 = inlined_call_operand.vmem [shape: f32[16,128], index: 1, kind: input, shape index: {}]
  %s2 = inlined_call_operand.vmem [shape: f32[8,128], index: 2, kind: output, shape index: {}]
  %s3 = sld [smem:[#allocation0]]
  $region22: #{_wing_loss_impl.1} parent=0
    _
  %s5 = ssub.s32 1, %s3
  %s6 = scalar_select 0, %s5, %s3
  // Predicated region
  $region2: #{_wing_loss_impl.1} parent=0 // pred_check
    _
  $region3: #{_wing_loss_impl.1} parent=0 // pred_check_branch
    %8 = sbr.rel (0) target = $region5
  $region4: #{_wing_loss_impl.1} parent=0 // pred_region
    %s9 = sadd.s32 0, 0
    %p10 = scmp.lt.s32.totalorder %s9, 0
    %s11 = scalar_select %p10, %s9, 0
    %s12 = smul.u32 2, %s11
    %p13 = scmp.lt.s32.totalorder %s12, 1
    %s14 = scalar_select %p13, %s12, 1
    %s15 = smul.addr %s14, 8
    %s16 = scalar_lea.vmem %s0, %s15
    %s17 = sadd.s32 0, 0
    %p18 = scmp.lt.s32.totalorder %s17, 0
    %s19 = scalar_select %p18, %s17, 0
    %s20 = smul.u32 2, %s19
  $region5: #{_wing_loss_impl.1} parent=0 // pred_fallthru
    _
  // Predicated region
  $region6: #{_wing_loss_impl.1} parent=0 // pred_check
    _
  $region7: #{_wing_loss_impl.1} parent=0 // pred_check_branch
    %22 = sbr.rel (0) target = $region9
  $region8: #{_wing_loss_impl.1} parent=0 // pred_region
    %s23 = sadd.s32 0, 0
    %p24 = scmp.lt.s32.totalorder %s23, 0
    %s25 = scalar_select %p24, %s23, 0
    %s26 = smul.u32 2, %s25
    %p27 = scmp.lt.s32.totalorder %s26, 1
    %s28 = scalar_select %p27, %s26, 1
    %s29 = smul.addr %s28, 8
    %s30 = scalar_lea.vmem %s1, %s29
    %s31 = sadd.s32 0, 0
    %p32 = scmp.lt.s32.totalorder %s31, 0
    %s33 = scalar_select %p32, %s31, 0
    %s34 = smul.u32 2, %s33
  $region9: #{_wing_loss_impl.1} parent=0 // pred_fallthru
    _
  %s35 = sadd.s32 0, 0
  %p36 = scmp.lt.s32.totalorder %s35, 0
  %s37 = scalar_select %p36, %s35, 0
  %s38 = smul.u32 2, %s37
  %p39 = scmp.lt.s32.totalorder %s38, 1
  %s40 = scalar_select %p39, %s38, 1
  %s41 = smul.addr %s40, 8
  %s42 = scalar_lea.vmem %s0, %s41
  %s43 = sadd.s32 0, 0
  %p44 = scmp.lt.s32.totalorder %s43, 0
  %s45 = scalar_select %p44, %s43, 0
  %s46 = smul.u32 2, %s45
  %p47 = scmp.lt.s32.totalorder %s46, 1
  %s48 = scalar_select %p47, %s46, 1
  %s49 = smul.addr %s48, 8
  %s50 = scalar_lea.vmem %s1, %s49
  %s51 = sadd.s32 0, 0
  %p52 = scmp.lt.s32.totalorder %s51, 0
  %s53 = scalar_select %p52, %s51, 0
  %s54 = smul.u32 2, %s53
  %p55 = scmp.lt.s32.totalorder %s54, 1
  %s56 = scalar_select %p55, %s54, 1
  %s57 = smul.addr %s56, 8
  %s58 = scalar_lea.vmem %s0, %s57
  %s59 = sadd.s32 0, 0
  %p60 = scmp.lt.s32.totalorder %s59, 0
  %s61 = scalar_select %p60, %s59, 0
  %s62 = smul.u32 2, %s61
  %s63 = sadd.s32 0, 0
  %p64 = scmp.lt.s32.totalorder %s63, 0
  %s65 = scalar_select %p64, %s63, 0
  %s66 = smul.u32 2, %s65
  %p67 = scmp.lt.s32.totalorder %s66, 1
  %s68 = scalar_select %p67, %s66, 1
  %s69 = smul.addr %s68, 8
  %s70 = scalar_lea.vmem %s1, %s69
  %s71 = sadd.s32 0, 0
  %p72 = scmp.lt.s32.totalorder %s71, 0
  %s73 = scalar_select %p72, %s71, 0
  %s74 = smul.u32 2, %s73
  %p75 = scmp.eq.s32.totalorder 0, 0
  // Predicated region
  $region10: #{_wing_loss_impl.1} parent=0 // pred_check
    %p76 = pneg %p75
  $region11: #{_wing_loss_impl.1} parent=0 // pred_check_branch
    %78 = sbr.rel (%p76) target = $region13
  $region12: #{_wing_loss_impl.1} parent=0 // pred_region
    %79 = vst [vmem:[%s2] sm:$0xff] 0.0
  $region13: #{_wing_loss_impl.1} parent=0 // pred_fallthru
    _
  %v80 = vld [vmem:[%s2] sm:$0xff]
  %v81 = vld [vmem:[%s58] sm:$0xff]
  %v82 = vld [vmem:[%s58 + $0x8] sm:$0xff]
  %v83 = vld [vmem:[%s70] sm:$0xff]
  %v84 = vld [vmem:[%s70 + $0x8] sm:$0xff]
  %vm85 = vcmp.ne.f32.partialorder %v83, -1.0
  %vm86 = vcmp.ne.f32.partialorder %v84, -1.0
  %v87 = vsub.f32 %v81, %v83
  %v88 = vsub.f32 %v82, %v84
  %v89 = vsel %vm85, %v87, 0.0
  %v90 = vsel %vm86, %v88, 0.0
  %v91 = vand.u32 2147483647, %v89
  %v92 = vand.u32 2147483647, %v90
  %vm93 = vcmp.lt.f32.partialorder %v91, 10.0
  %vm94 = vcmp.lt.f32.partialorder %v92, 10.0
  %v95 = vmul.f32 %v91, 0.5
  %v96 = vmul.f32 %v92, 0.5
  %v97 = vadd.f32 %v95, 1.0
  %v98 = vlog2.pop %v97
  %v99 = vmul.f32 %v98, 0.6931472
  %v100 = vmul.f32 -0.5, %v95
  %v101 = vadd.f32 %v100, 1.0
  %v102 = vmul.f32 %v101, %v95
  %v103 = vand.u32 2147483647, %v95
  %vm104 = vcmp.lt.f32.partialorder %v103, 0.0004427343
  %v105 = vsel %vm104, %v102, %v99
  %v106 = vadd.f32 %v96, 1.0
  %v107 = vlog2.pop %v106
  %v108 = vmul.f32 %v107, 0.6931472
  %v109 = vmul.f32 -0.5, %v96
  %v110 = vadd.f32 %v109, 1.0
  %v111 = vmul.f32 %v110, %v96
  %v112 = vand.u32 2147483647, %v96
  %vm113 = vcmp.lt.f32.partialorder %v112, 0.0004427343
  %v114 = vsel %vm113, %v111, %v108
  %v115 = vmul.f32 %v105, 10.0
  %v116 = vmul.f32 %v114, 10.0
  %v117 = vsub.f32 %v91, -7.917595
  %v118 = vsub.f32 %v92, -7.917595
  %v119 = vsel %vm93, %v115, %v117
  %v120 = vsel %vm94, %v116, %v118
  %v121 = vadd.f32 %v119, %v120
  %v122 = vadd.f32 %v121, 0.0
  %v123 = vadd.f32 %v80, %v122
  %124 = vst [vmem:[%s2] sm:$0xff] %v123
  // Predicated region
  $region14: #{_wing_loss_impl.1} parent=0 // pred_check
    _
  $region15: #{_wing_loss_impl.1} parent=0 // pred_check_branch
    %126 = sbr.rel (0) target = $region17
  $region16: #{_wing_loss_impl.1} parent=0 // pred_region
    _
  $region17: #{_wing_loss_impl.1} parent=0 // pred_fallthru
    _
  // Predicated region
  $region18: #{_wing_loss_impl.1} parent=0 // pred_check
    _
  $region19: #{_wing_loss_impl.1} parent=0 // pred_check_branch
    %128 = sbr.rel (0) target = $region21
  $region20: #{_wing_loss_impl.1} parent=0 // pred_region
    _
  $region21: #{_wing_loss_impl.1} parent=0 // pred_fallthru
    _

</llo_original>
